<compile_context>
chip_gen: v7x
topology: tpu7x:2x2x1
jax: 0.10.0
libtpu: 0.0.40
codegen_flags: <defaults>
</compile_context>

<pallas_src>
import functools

import jax
import jax.numpy as jnp
from jax import lax
from jax.experimental import pallas as pl
from jax.experimental.pallas import tpu as pltpu


# ----------------------------------------------------------------------------
# Deterministic parameter init (mirrors init_kernel / gaussian in the module).
# ----------------------------------------------------------------------------
def gaussian_1d(kernel_size: int, sigma: float) -> jnp.ndarray:
    xs = jnp.arange(kernel_size, dtype=jnp.float32)
    g = jnp.exp(-((xs - kernel_size // 2) ** 2) / float(2 * sigma ** 2))
    return g / jnp.sum(g)


def init_kernel(kernel_size: int, channel: int) -> jnp.ndarray:
    g1 = gaussian_1d(kernel_size, 1.5)[:, None]                   # (ks, 1)
    g2 = (g1 @ g1.T).astype(jnp.float32)                          # (ks, ks)
    k = jnp.broadcast_to(g2[None, None], (channel, 1, kernel_size, kernel_size))
    return k.astype(jnp.float32)                                  # (C, 1, ks, ks)


# ----------------------------------------------------------------------------
# Banded Toeplitz matrix for a 1-D "same" correlation with zero padding.
#   (X @ M)[.., j] = sum_k X[.., k] * taps[k - j + pad]
# ----------------------------------------------------------------------------
def _conv_matrix(taps: jnp.ndarray, n: int, pad: int) -> jnp.ndarray:
    ks = taps.shape[0]
    k = jnp.arange(n)[:, None]
    j = jnp.arange(n)[None, :]
    idx = k - j + pad
    valid = (idx >= 0) & (idx < ks)
    return jnp.where(valid, taps[jnp.clip(idx, 0, ks - 1)], 0.0).astype(jnp.float32)


# ----------------------------------------------------------------------------
# Pallas kernel: one batch element per grid step; all channels in the lanes.
#   chl_ref : (H, H)       left matrix for the column (H) pass
#   cwb_ref : (CWt, CWt)   block-diagonal right matrix for the row (W) pass
#   x*_ref  : (1, H, CWt)  one batch element, channels folded into lanes
#   out_ref : (1, 8, 128)  lane-dense tile holding this step's partial sum
# ----------------------------------------------------------------------------
def _ssim_kernel(chl_ref, cwb_ref, x1_ref, x2_ref, out_ref, *, H, CWt):
    p1 = x1_ref[0]                     # (H, CWt)
    p2 = x2_ref[0]                     # (H, CWt)
    chl = chl_ref[...]                 # (H, H)
    cwb = cwb_ref[...]                 # (CWt, CWt)

    # Stack the 5 conv operands along sublanes -> one big row-pass matmul.
    stack = jnp.concatenate(
        [p1, p2, p1 * p1, p2 * p2, p1 * p2], axis=0)              # (5H, CWt)
    rowp = jnp.dot(stack, cwb, preferred_element_type=jnp.float32)  # (5H, CWt)

    # Column pass: 5 small 2-D MXU matmuls on statically aligned slices.
    conv = [
        jnp.dot(chl, rowp[o * H:(o + 1) * H, :],
                preferred_element_type=jnp.float32)
        for o in range(5)
    ]
    mu1, mu2, e11, e22, e12 = conv

    mu1_sq = mu1 * mu1
    mu2_sq = mu2 * mu2
    mu1_mu2 = mu1 * mu2
    sigma1_sq = e11 - mu1_sq
    sigma2_sq = e22 - mu2_sq
    sigma12 = e12 - mu1_mu2

    C1 = 0.01 ** 2
    C2 = 0.03 ** 2
    num = (2.0 * mu1_mu2 + C1) * (2.0 * sigma12 + C2)
    den = (mu1_sq + mu2_sq + C1) * (sigma1_sq + sigma2_sq + C2)
    ssim_map = num / den                                          # (H, CWt)

    # Per-step partial sum, written as a full unmasked (8, 128) tile.
    partial = jnp.sum(ssim_map)
    out_ref[0] = jnp.full((8, 128), partial, dtype=jnp.float32)


# ----------------------------------------------------------------------------
# Wrapper (the SSIM.forward equivalent).
# ----------------------------------------------------------------------------
def ssim_pallas(img1: jnp.ndarray, img2: jnp.ndarray, weight: jnp.ndarray) -> jnp.ndarray:
    N, C, H, W = img1.shape
    ks = weight.shape[-1]
    pad = ks // 2
    CWt = C * W

    # Recover the 1-D Gaussian taps from the rank-1 2-D parameter (exact for
    # the module's init: weight[c,0] = g g^T for every channel).
    w2d = weight[0, 0].astype(jnp.float32)                        # (ks, ks)
    mid = ks // 2
    g = w2d[:, mid] / jnp.sqrt(w2d[mid, mid])                     # (ks,)

    m_w = _conv_matrix(g, W, pad)                                 # (W, W)   row pass (right-mult)
    m_h = _conv_matrix(g, H, pad).T                               # (H, H)   col pass (left-mult)
    cwb = jnp.kron(jnp.eye(C, dtype=jnp.float32), m_w)            # (C*W, C*W) block-diag

    # Layout plumbing (in JAX, outside the kernel): fold channels into lanes.
    x1 = jnp.transpose(img1.astype(jnp.float32), (0, 2, 1, 3)).reshape(N, H, CWt)
    x2 = jnp.transpose(img2.astype(jnp.float32), (0, 2, 1, 3)).reshape(N, H, CWt)

    partials = pl.pallas_call(
        functools.partial(_ssim_kernel, H=H, CWt=CWt),
        out_shape=jax.ShapeDtypeStruct((N, 8, 128), jnp.float32),
        grid=(N,),
        in_specs=[
            pl.BlockSpec((H, H), lambda n: (0, 0)),
            pl.BlockSpec((CWt, CWt), lambda n: (0, 0)),
            pl.BlockSpec((1, H, CWt), lambda n: (n, 0, 0)),
            pl.BlockSpec((1, H, CWt), lambda n: (n, 0, 0)),
        ],
        out_specs=pl.BlockSpec((1, 8, 128), lambda n: (n, 0, 0)),
        compiler_params=pltpu.CompilerParams(
            dimension_semantics=("parallel",),
        ),
    )(m_h, cwb, x1, x2)

    # Finish the mean in JAX (per-step partial sums, no shared accumulator).
    return partials[:, 0, 0].sum() / float(N * C * H * W)


# ----------------------------------------------------------------------------
# Pure-JAX reference (for correctness check only).
# ----------------------------------------------------------------------------
def ssim_ref(img1, img2, weight):
    C = img1.shape[1]
    ks = weight.shape[-1]

    def conv(x):
        return lax.conv_general_dilated(
            x, weight, window_strides=(1, 1),
            padding=[(ks // 2, ks // 2), (ks // 2, ks // 2)],
            feature_group_count=C,
            dimension_numbers=("NCHW", "OIHW", "NCHW"),
        )

    mu1, mu2 = conv(img1), conv(img2)
    mu1_sq, mu2_sq, mu1_mu2 = mu1 * mu1, mu2 * mu2, mu1 * mu2
    s1 = conv(img1 * img1) - mu1_sq
    s2 = conv(img2 * img2) - mu2_sq
    s12 = conv(img1 * img2) - mu1_mu2
    C1, C2 = 0.01 ** 2, 0.03 ** 2
    m = (2 * mu1_mu2 + C1) * (2 * s12 + C2) / ((mu1_sq + mu2_sq + C1) * (s1 + s2 + C2))
    return jnp.mean(m)


if __name__ == "__main__":
    N, C, H, W = 2, 4, 16, 16
    KS = 11

    key = jax.random.PRNGKey(0)
    k1, k2 = jax.random.split(key)
    img1 = jax.random.uniform(k1, (N, C, H, W), dtype=jnp.float32)
    img2 = jax.random.uniform(k2, (N, C, H, W), dtype=jnp.float32)

    weight = init_kernel(KS, C)  # the SSIM module's Parameter, (C, 1, KS, KS)

    out = jax.block_until_ready(ssim_pallas(img1, img2, weight))
    ref = jax.block_until_ready(ssim_ref(img1, img2, weight))
    assert abs(float(out) - float(ref)) < 1e-4, (float(out), float(ref))

    print("KERNEL_OK")
</pallas_src>

<mosaic_0001>
module attributes {stable_mosaic.version = 11 : i64} {
  func.func @_ssim_kernel(%arg0: i32, %arg1: memref<16x16xf32, #tpu.memory_space<vmem>>, %arg2: memref<64x64xf32, #tpu.memory_space<vmem>>, %arg3: memref<1x16x64xf32, #tpu.memory_space<vmem>>, %arg4: memref<1x16x64xf32, #tpu.memory_space<vmem>>, %arg5: memref<1x8x128xf32, #tpu.memory_space<vmem>>) attributes {dimension_semantics = [#tpu.dimension_semantics<parallel>], iteration_bounds = array<i64: 2>, scalar_prefetch = 0 : i64, scratch_operands = 0 : i64, tpu.core_type = #tpu.core_type<tc>, window_params = [{pipeline_mode = #tpu.pipeline_mode<synchronous>, transform_indices = @transform_0, window_bounds = array<i64: 16, 16>}, {pipeline_mode = #tpu.pipeline_mode<synchronous>, transform_indices = @transform_1, window_bounds = array<i64: 64, 64>}, {transform_indices = @transform_2, window_bounds = array<i64: 1, 16, 64>}, {transform_indices = @transform_3, window_bounds = array<i64: 1, 16, 64>}, {transform_indices = @transform_4, window_bounds = array<i64: 1, 8, 128>}]} {
    %c0 = arith.constant 0 : index
    %c0_0 = arith.constant 0 : index
    %c0_1 = arith.constant 0 : index
    %0 = vector.load %arg3[%c0, %c0_0, %c0_1] : memref<1x16x64xf32, #tpu.memory_space<vmem>>, vector<1x16x64xf32>
    %1 = vector.shape_cast %0 : vector<1x16x64xf32> to vector<16x64xf32>
    %c0_2 = arith.constant 0 : index
    %c0_3 = arith.constant 0 : index
    %c0_4 = arith.constant 0 : index
    %2 = vector.load %arg4[%c0_2, %c0_3, %c0_4] : memref<1x16x64xf32, #tpu.memory_space<vmem>>, vector<1x16x64xf32>
    %3 = vector.shape_cast %2 : vector<1x16x64xf32> to vector<16x64xf32>
    %c0_5 = arith.constant 0 : index
    %c0_6 = arith.constant 0 : index
    %4 = vector.load %arg1[%c0_5, %c0_6] : memref<16x16xf32, #tpu.memory_space<vmem>>, vector<16x16xf32>
    %c0_7 = arith.constant 0 : index
    %c0_8 = arith.constant 0 : index
    %5 = vector.load %arg2[%c0_7, %c0_8] : memref<64x64xf32, #tpu.memory_space<vmem>>, vector<64x64xf32>
    %6 = arith.mulf %1, %1 : vector<16x64xf32>
    %7 = arith.mulf %3, %3 : vector<16x64xf32>
    %8 = arith.mulf %1, %3 : vector<16x64xf32>
    %9 = tpu.concatenate %1, %3, %6, %7, %8 in 0 : vector<16x64xf32>, vector<16x64xf32>, vector<16x64xf32>, vector<16x64xf32>, vector<16x64xf32> -> vector<80x64xf32>
    %cst = arith.constant dense<0.000000e+00> : vector<80x64xf32>
    %10 = tpu.matmul %9, %5, %cst {dimension_numbers = #tpu.dot_dimension_numbers<[1], [0], [0], [1], [0, 0, 1, 1], [], []>} : vector<80x64xf32>, vector<64x64xf32>, vector<80x64xf32> -> vector<80x64xf32>
    %11 = vector.extract_strided_slice %10 {offsets = [0, 0], sizes = [16, 64], strides = [1, 1]} : vector<80x64xf32> to vector<16x64xf32>
    %cst_9 = arith.constant dense<0.000000e+00> : vector<16x64xf32>
    %12 = tpu.matmul %4, %11, %cst_9 {dimension_numbers = #tpu.dot_dimension_numbers<[1], [0], [0], [1], [0, 0, 1, 1], [], []>} : vector<16x16xf32>, vector<16x64xf32>, vector<16x64xf32> -> vector<16x64xf32>
    %13 = vector.extract_strided_slice %10 {offsets = [16, 0], sizes = [16, 64], strides = [1, 1]} : vector<80x64xf32> to vector<16x64xf32>
    %cst_10 = arith.constant dense<0.000000e+00> : vector<16x64xf32>
    %14 = tpu.matmul %4, %13, %cst_10 {dimension_numbers = #tpu.dot_dimension_numbers<[1], [0], [0], [1], [0, 0, 1, 1], [], []>} : vector<16x16xf32>, vector<16x64xf32>, vector<16x64xf32> -> vector<16x64xf32>
    %15 = vector.extract_strided_slice %10 {offsets = [32, 0], sizes = [16, 64], strides = [1, 1]} : vector<80x64xf32> to vector<16x64xf32>
    %cst_11 = arith.constant dense<0.000000e+00> : vector<16x64xf32>
    %16 = tpu.matmul %4, %15, %cst_11 {dimension_numbers = #tpu.dot_dimension_numbers<[1], [0], [0], [1], [0, 0, 1, 1], [], []>} : vector<16x16xf32>, vector<16x64xf32>, vector<16x64xf32> -> vector<16x64xf32>
    %17 = vector.extract_strided_slice %10 {offsets = [48, 0], sizes = [16, 64], strides = [1, 1]} : vector<80x64xf32> to vector<16x64xf32>
    %cst_12 = arith.constant dense<0.000000e+00> : vector<16x64xf32>
    %18 = tpu.matmul %4, %17, %cst_12 {dimension_numbers = #tpu.dot_dimension_numbers<[1], [0], [0], [1], [0, 0, 1, 1], [], []>} : vector<16x16xf32>, vector<16x64xf32>, vector<16x64xf32> -> vector<16x64xf32>
    %19 = vector.extract_strided_slice %10 {offsets = [64, 0], sizes = [16, 64], strides = [1, 1]} : vector<80x64xf32> to vector<16x64xf32>
    %cst_13 = arith.constant dense<0.000000e+00> : vector<16x64xf32>
    %20 = tpu.matmul %4, %19, %cst_13 {dimension_numbers = #tpu.dot_dimension_numbers<[1], [0], [0], [1], [0, 0, 1, 1], [], []>} : vector<16x16xf32>, vector<16x64xf32>, vector<16x64xf32> -> vector<16x64xf32>
    %21 = arith.mulf %12, %12 : vector<16x64xf32>
    %22 = arith.mulf %14, %14 : vector<16x64xf32>
    %23 = arith.mulf %12, %14 : vector<16x64xf32>
    %24 = arith.subf %16, %21 : vector<16x64xf32>
    %25 = arith.subf %18, %22 : vector<16x64xf32>
    %26 = arith.subf %20, %23 : vector<16x64xf32>
    %cst_14 = arith.constant 2.000000e+00 : f32
    %27 = vector.broadcast %cst_14 : f32 to vector<16x64xf32>
    %28 = arith.mulf %27, %23 : vector<16x64xf32>
    %cst_15 = arith.constant 9.99999974E-5 : f32
    %29 = vector.broadcast %cst_15 : f32 to vector<16x64xf32>
    %30 = arith.addf %28, %29 : vector<16x64xf32>
    %cst_16 = arith.constant 2.000000e+00 : f32
    %31 = vector.broadcast %cst_16 : f32 to vector<16x64xf32>
    %32 = arith.mulf %31, %26 : vector<16x64xf32>
    %cst_17 = arith.constant 8.99999984E-4 : f32
    %33 = vector.broadcast %cst_17 : f32 to vector<16x64xf32>
    %34 = arith.addf %32, %33 : vector<16x64xf32>
    %35 = arith.mulf %30, %34 : vector<16x64xf32>
    %36 = arith.addf %21, %22 : vector<16x64xf32>
    %cst_18 = arith.constant 9.99999974E-5 : f32
    %37 = vector.broadcast %cst_18 : f32 to vector<16x64xf32>
    %38 = arith.addf %36, %37 : vector<16x64xf32>
    %39 = arith.addf %24, %25 : vector<16x64xf32>
    %cst_19 = arith.constant 8.99999984E-4 : f32
    %40 = vector.broadcast %cst_19 : f32 to vector<16x64xf32>
    %41 = arith.addf %39, %40 : vector<16x64xf32>
    %42 = arith.mulf %38, %41 : vector<16x64xf32>
    %43 = arith.divf %35, %42 : vector<16x64xf32>
    %44 = vector.shape_cast %43 : vector<16x64xf32> to vector<1x16x64xf32>
    %cst_20 = arith.constant dense<0.000000e+00> : vector<1xf32>
    %45 = vector.multi_reduction <add>, %44, %cst_20 [1, 2] : vector<1x16x64xf32> to vector<1xf32>
    %46 = vector.shape_cast %45 : vector<1xf32> to vector<1x1x1xf32>
    %47 = vector.extract %46[0, 0, 0] : f32 from vector<1x1x1xf32>
    %48 = vector.broadcast %47 : f32 to vector<8x128xf32>
    %c0_21 = arith.constant 0 : index
    %c0_22 = arith.constant 0 : index
    %c0_23 = arith.constant 0 : index
    %49 = vector.load %arg5[%c0_21, %c0_22, %c0_23] : memref<1x8x128xf32, #tpu.memory_space<vmem>>, vector<1x8x128xf32>
    %50 = vector.shape_cast %49 : vector<1x8x128xf32> to vector<8x128xf32>
    %51 = vector.shape_cast %48 : vector<8x128xf32> to vector<1x8x128xf32>
    tpu.vector_store %arg5[%c0_21, %c0_22, %c0_23], %51 {strides = array<i32>} : memref<1x8x128xf32, #tpu.memory_space<vmem>>, vector<1x8x128xf32>,
    return
  }
  func.func @transform_0(%arg0: i32) -> (i32, i32) {
    %c0_i32 = arith.constant 0 : i32
    %c0_i32_0 = arith.constant 0 : i32
    %c0_i32_1 = arith.constant 0 : i32
    return %c0_i32, %c0_i32_0 : i32, i32
  }
  func.func @transform_1(%arg0: i32) -> (i32, i32) {
    %c0_i32 = arith.constant 0 : i32
    %c0_i32_0 = arith.constant 0 : i32
    %c0_i32_1 = arith.constant 0 : i32
    return %c0_i32, %c0_i32_0 : i32, i32
  }
  func.func @transform_2(%arg0: i32) -> (i32, i32, i32) {
    %c0_i32 = arith.constant 0 : i32
    %c0_i32_0 = arith.constant 0 : i32
    %c0_i32_1 = arith.constant 0 : i32
    return %arg0, %c0_i32, %c0_i32_0 : i32, i32, i32
  }
  func.func @transform_3(%arg0: i32) -> (i32, i32, i32) {
    %c0_i32 = arith.constant 0 : i32
    %c0_i32_0 = arith.constant 0 : i32
    %c0_i32_1 = arith.constant 0 : i32
    return %arg0, %c0_i32, %c0_i32_0 : i32, i32, i32
  }
  func.func @transform_4(%arg0: i32) -> (i32, i32, i32) {
    %c0_i32 = arith.constant 0 : i32
    %c0_i32_0 = arith.constant 0 : i32
    %c0_i32_1 = arith.constant 0 : i32
    return %arg0, %c0_i32, %c0_i32_0 : i32, i32, i32
  }
}

</mosaic_0001>

<llo_original>
// kernel: tpu_custom_call.1
$region0: #{tpu_custom_call.1}
  #allocation0 [shape = 'u32[]', space=smem, size = 0x4, offset = 0x4, fixed_abs, tag = 'smem constant byte address 0x4 - core index']
  #allocation1 [shape = 'u32[144,128]{1,0:T(1,128)}', space=vmem, size = 0x12000, scoped, tag = 'internal scratch']
  %s0 = inlined_call_operand.hbm [shape: f32[16,16], index: 0, kind: input, shape index: {}]
  %s1 = inlined_call_operand.hbm [shape: f32[64,64], index: 1, kind: input, shape index: {}]
  %s2 = inlined_call_operand.hbm [shape: f32[2,16,64], index: 2, kind: input, shape index: {}]
  %s3 = inlined_call_operand.hbm [shape: f32[2,16,64], index: 3, kind: input, shape index: {}]
  %s4 = inlined_call_operand.hbm [shape: f32[2,8,128], index: 4, kind: output, shape index: {}]
  %s5 = sld [smem:[#allocation0]]
  $region65: #{tpu_custom_call.1} parent=0
    _
  %s7 = ssub.s32 1, %s5
  %s8 = scalar_select 0, %s7, %s5
  $region1: #{tpu_custom_call.1} parent=0
    #allocation2 [shape = 'u8[8192]{0}', space=vmem, size = 0x2000, scoped, tag = 'input window, operand 0, single buffered']
    #allocation3 [shape = 's32[2]{0}', space=sflag, size = 0x8, scoped, tag = 'scoped memory for tpu_custom_call.1']
    #allocation4 [shape = 's32[2]{0}', space=sflag, size = 0x8, scoped, tag = 'scoped memory for tpu_custom_call.1']
    #allocation5 [shape = 'u8[32768]{0}', space=vmem, size = 0x8000, scoped, tag = 'input window, operand 1, single buffered']
    #allocation6 [shape = 's32[1]{0}', space=sflag, size = 0x4, scoped, tag = 'scoped memory for tpu_custom_call.1']
    #allocation7 [shape = 'u8[16384]{0}', space=vmem, size = 0x4000, scoped, tag = 'input window, operand 2']
    #allocation8 [shape = 'u8[16384]{0}', space=vmem, size = 0x4000, scoped, tag = 'input window, operand 3']
    #allocation9 [shape = 'u8[8192]{0}', space=vmem, size = 0x2000, scoped, tag = 'output window, operand 0']
    %9 = vsyncpa [#allocation3], 0
    %10 = vsyncpa [#allocation6], 0
    %11 = vsyncpa [#allocation4], 0
    %s12 = scalar_lea.sflag [#allocation4], 1
    %13 = vsyncpa %s12, 0
    loop: start=0, step=1, limit=4
    $region2: #{tpu_custom_call.1} parent=1 // loop_pre_header
      _
    $region3: #{tpu_custom_call.1} parent=1 // loop_header
      %s15 = sphi 0, %s19
      %p16 = scmp.ge.s32.totalorder %s15, 4
      %s23 = sphi 0, %s23
      %s25 = sphi 0, %s23
      %s26 = sphi 0, %s25
      %s40 = sphi 0, %s26
      %s44 = sphi 0, %s44
      %s46 = sphi 0, %s44
      %s47 = sphi 0, %s46
      %s61 = sphi 0, %s47
      %s67 = sphi 0, %s69
      %s70 = sphi 0, %s67
      %s71 = sphi 0, %s70
      %s87 = sphi 0, %s71
      %s93 = sphi 0, %s95
      %s96 = sphi 0, %s93
      %s97 = sphi 0, %s96
      %s113 = sphi 0, %s97
      %s119 = sphi 0, %s121
      %s122 = sphi 0, %s119
      %s123 = sphi 0, %s122
      %s139 = sphi 0, %s123
    $region4: #{tpu_custom_call.1} parent=1 // loop_header_branch
      %18 = sbr.rel (%p16) target = $region8
    $region5: #{tpu_custom_call.1} parent=1 // loop_body
      %s20 = ssub.s32 %s15, 1
      %s21 = ssub.s32 %s15, 2
      %s22 = sadd.s32 %s15, 1
      %s24 = sadd.s32 %s23, 1
      %p27 = scmp.eq.s32.totalorder %s15, 1
      %p28 = scmp.ne.s32.totalorder %s23, %s25
      %p29 = scmp.eq.s32.totalorder %s15, 0
      %p30 = por %p28, %p29
      %p31 = scmp.ne.s32.totalorder %s23, %s25
      %p32 = scmp.eq.s32.totalorder %s20, 1
      %p33 = por %p31, %p32
      %p34 = scmp.ne.s32.totalorder %s25, %s26
      %p35 = scmp.eq.s32.totalorder %s20, 0
      %p36 = por %p34, %p35
      %p37 = scmp.ne.s32.totalorder %s25, %s26
      %p38 = scmp.eq.s32.totalorder %s21, 1
      %p39 = por %p37, %p38
      %p41 = scmp.ne.s32.totalorder %s26, %s40
      %p42 = scmp.eq.s32.totalorder %s21, 0
      %p43 = por %p41, %p42
      %s45 = sadd.s32 %s44, 1
      %p48 = scmp.eq.s32.totalorder %s15, 1
      %p49 = scmp.ne.s32.totalorder %s44, %s46
      %p50 = scmp.eq.s32.totalorder %s15, 0
      %p51 = por %p49, %p50
      %p52 = scmp.ne.s32.totalorder %s44, %s46
      %p53 = scmp.eq.s32.totalorder %s20, 1
      %p54 = por %p52, %p53
      %p55 = scmp.ne.s32.totalorder %s46, %s47
      %p56 = scmp.eq.s32.totalorder %s20, 0
      %p57 = por %p55, %p56
      %p58 = scmp.ne.s32.totalorder %s46, %s47
      %p59 = scmp.eq.s32.totalorder %s21, 1
      %p60 = por %p58, %p59
      %p62 = scmp.ne.s32.totalorder %s47, %s61
      %p63 = scmp.eq.s32.totalorder %s21, 0
      %p64 = por %p62, %p63
      %s65 = ssub.s32 %s15, %s22
      %p66 = scmp.eq.s32.totalorder %s65, 0
      %s68 = sadd.s32 %s67, 1
      %s69 = scalar_select %p66, %s67, %s68
      %p72 = pneg %p66
      %p73 = scmp.eq.s32.totalorder %s15, 1
      %p74 = por %p72, %p73
      %p75 = scmp.ne.s32.totalorder %s67, %s70
      %p76 = scmp.eq.s32.totalorder %s15, 0
      %p77 = por %p75, %p76
      %p78 = scmp.ne.s32.totalorder %s67, %s70
      %p79 = scmp.eq.s32.totalorder %s20, 1
      %p80 = por %p78, %p79
      %p81 = scmp.ne.s32.totalorder %s70, %s71
      %p82 = scmp.eq.s32.totalorder %s20, 0
      %p83 = por %p81, %p82
      %p84 = scmp.ne.s32.totalorder %s70, %s71
      %p85 = scmp.eq.s32.totalorder %s21, 1
      %p86 = por %p84, %p85
      %p88 = scmp.ne.s32.totalorder %s71, %s87
      %p89 = scmp.eq.s32.totalorder %s21, 0
      %p90 = por %p88, %p89
      %s91 = ssub.s32 %s15, %s22
      %p92 = scmp.eq.s32.totalorder %s91, 0
      %s94 = sadd.s32 %s93, 1
      %s95 = scalar_select %p92, %s93, %s94
      %p98 = pneg %p92
      %p99 = scmp.eq.s32.totalorder %s15, 1
      %p100 = por %p98, %p99
      %p101 = scmp.ne.s32.totalorder %s93, %s96
      %p102 = scmp.eq.s32.totalorder %s15, 0
      %p103 = por %p101, %p102
      %p104 = scmp.ne.s32.totalorder %s93, %s96
      %p105 = scmp.eq.s32.totalorder %s20, 1
      %p106 = por %p104, %p105
      %p107 = scmp.ne.s32.totalorder %s96, %s97
      %p108 = scmp.eq.s32.totalorder %s20, 0
      %p109 = por %p107, %p108
      %p110 = scmp.ne.s32.totalorder %s96, %s97
      %p111 = scmp.eq.s32.totalorder %s21, 1
      %p112 = por %p110, %p111
      %p114 = scmp.ne.s32.totalorder %s97, %s113
      %p115 = scmp.eq.s32.totalorder %s21, 0
      %p116 = por %p114, %p115
      %s117 = ssub.s32 %s15, %s22
      %p118 = scmp.eq.s32.totalorder %s117, 0
      %s120 = sadd.s32 %s119, 1
      %s121 = scalar_select %p118, %s119, %s120
      %p124 = pneg %p118
      %p125 = scmp.eq.s32.totalorder %s15, 1
      %p126 = por %p124, %p125
      %p127 = scmp.ne.s32.totalorder %s119, %s122
      %p128 = scmp.eq.s32.totalorder %s15, 0
      %p129 = por %p127, %p128
      %p130 = scmp.ne.s32.totalorder %s119, %s122
      %p131 = scmp.eq.s32.totalorder %s20, 1
      %p132 = por %p130, %p131
      %p133 = scmp.ne.s32.totalorder %s122, %s123
      %p134 = scmp.eq.s32.totalorder %s20, 0
      %p135 = por %p133, %p134
      %p136 = scmp.ne.s32.totalorder %s122, %s123
      %p137 = scmp.eq.s32.totalorder %s21, 1
      %p138 = por %p136, %p137
      %p140 = scmp.ne.s32.totalorder %s123, %s139
      %p141 = scmp.eq.s32.totalorder %s21, 0
      %p142 = por %p140, %p141
      %p143 = scmp.le.s32.totalorder 1, %s15
      %p144 = scmp.lt.s32.totalorder %s15, 3
      %p145 = pnand %p143, %p144
      %p146 = pneg %p145
      // Predicated region
      $region9: #{tpu_custom_call.1} parent=5 // pred_check
        _
      $region10: #{tpu_custom_call.1} parent=5 // pred_check_branch
        %148 = sbr.rel (%p145) target = $region12
      $region11: #{tpu_custom_call.1} parent=5 // pred_region
        %s149 = ssub.s32 %s15, 1
        // Predicated region
        $region13: #{tpu_custom_call.1} parent=11 // pred_check
          %p150 = pneg %p36
        $region14: #{tpu_custom_call.1} parent=11 // pred_check_branch
          %152 = sbr.rel (%p150) target = $region16
        $region15: #{tpu_custom_call.1} parent=11 // pred_region
          %s154 = ssub.s32 256, 256
          %155 = vsyncadd [#allocation3], %s154
          %s156 = sshll.u32 [#allocation2], 4
          %s157 = int_to_ptr.vmem [resolvable:$true] %s156
          %162 = dma.hbm_to_vmem [thread:$0]  %s0, 256, %s157, [#allocation3], 128, 128, 8
        $region16: #{tpu_custom_call.1} parent=11 // pred_fallthru
          _
        // Predicated region
        $region17: #{tpu_custom_call.1} parent=11 // pred_check
          %p163 = pneg %p57
        $region18: #{tpu_custom_call.1} parent=11 // pred_check_branch
          %165 = sbr.rel (%p163) target = $region20
        $region19: #{tpu_custom_call.1} parent=11 // pred_region
          %s167 = ssub.s32 1024, 1024
          %168 = vsyncadd [#allocation6], %s167
          %s169 = sshll.u32 [#allocation5], 4
          %s170 = int_to_ptr.vmem [resolvable:$true] %s169
          %175 = dma.hbm_to_vmem [thread:$0]  %s1, 1024, %s170, [#allocation6], 128, 128, 8
        $region20: #{tpu_custom_call.1} parent=11 // pred_fallthru
          _
      $region12: #{tpu_custom_call.1} parent=5 // pred_fallthru
        _
      %p176 = scmp.lt.s32.totalorder %s15, 2
      // Predicated region
      $region21: #{tpu_custom_call.1} parent=5 // pred_check
        %p177 = pneg %p176
      $region22: #{tpu_custom_call.1} parent=5 // pred_check_branch
        %179 = sbr.rel (%p177) target = $region24
      $region23: #{tpu_custom_call.1} parent=5 // pred_region
        // Predicated region
        $region25: #{tpu_custom_call.1} parent=23 // pred_check
          %p180 = pneg %p77
        $region26: #{tpu_custom_call.1} parent=23 // pred_check_branch
          %182 = sbr.rel (%p180) target = $region28
        $region27: #{tpu_custom_call.1} parent=23 // pred_region
          %s183 = sand.u32 %s15, 1
          %s184 = scalar_lea.sflag [#allocation3], %s183
          %s185 = sand.u32 %s67, 1
          %s186 = smul.addr %s185, 16
          %s187 = scalar_lea.vmem [#allocation7], %s186
          %s189 = ssub.s32 256, 256
          %190 = vsyncadd %s184, %s189
          %s191 = smul.addr %s15, 2
          %s192 = smul.addr %s191, 128
          %s193 = scalar_lea.hbm %s2, %s192
          %s194 = sshll.u32 %s187, 4
          %s195 = int_to_ptr.vmem [resolvable:$true] %s194
          %200 = dma.hbm_to_vmem [thread:$0]  %s193, 256, %s195, %s184, 128, 128, 8
        $region28: #{tpu_custom_call.1} parent=23 // pred_fallthru
          _
        // Predicated region
        $region29: #{tpu_custom_call.1} parent=23 // pred_check
          %p201 = pneg %p103
        $region30: #{tpu_custom_call.1} parent=23 // pred_check_branch
          %203 = sbr.rel (%p201) target = $region32
        $region31: #{tpu_custom_call.1} parent=23 // pred_region
          %s204 = sand.u32 %s15, 1
          %s205 = scalar_lea.sflag [#allocation3], %s204
          %s206 = sand.u32 %s93, 1
          %s207 = smul.addr %s206, 16
          %s208 = scalar_lea.vmem [#allocation8], %s207
          %s210 = ssub.s32 256, 256
          %211 = vsyncadd %s205, %s210
          %s212 = smul.addr %s15, 2
          %s213 = smul.addr %s212, 128
          %s214 = scalar_lea.hbm %s3, %s213
          %s215 = sshll.u32 %s208, 4
          %s216 = int_to_ptr.vmem [resolvable:$true] %s215
          %221 = dma.hbm_to_vmem [thread:$0]  %s214, 256, %s216, %s205, 128, 128, 8
        $region32: #{tpu_custom_call.1} parent=23 // pred_fallthru
          _
      $region24: #{tpu_custom_call.1} parent=5 // pred_fallthru
        _
      %p222 = scmp.le.s32.totalorder 1, %s15
      %p223 = scmp.lt.s32.totalorder %s15, 3
      %p224 = pnand %p222, %p223
      %p225 = pneg %p224
      // Predicated region
      $region33: #{tpu_custom_call.1} parent=5 // pred_check
        _
      $region34: #{tpu_custom_call.1} parent=5 // pred_check_branch
        %227 = sbr.rel (%p224) target = $region36
      $region35: #{tpu_custom_call.1} parent=5 // pred_region
        %s228 = ssub.s32 %s15, 1
        // Predicated region
        $region37: #{tpu_custom_call.1} parent=35 // pred_check
          %p229 = pneg %p36
        $region38: #{tpu_custom_call.1} parent=35 // pred_check_branch
          %231 = sbr.rel (%p229) target = $region40
        $region39: #{tpu_custom_call.1} parent=35 // pred_region
          %232 = dma.done [#allocation3], 256
        $region40: #{tpu_custom_call.1} parent=35 // pred_fallthru
          _
        // Predicated region
        $region41: #{tpu_custom_call.1} parent=35 // pred_check
          %p233 = pneg %p57
        $region42: #{tpu_custom_call.1} parent=35 // pred_check_branch
          %235 = sbr.rel (%p233) target = $region44
        $region43: #{tpu_custom_call.1} parent=35 // pred_region
          %236 = dma.done [#allocation6], 1024
        $region44: #{tpu_custom_call.1} parent=35 // pred_fallthru
          _
        %s237 = sand.u32 %s20, 1
        %s238 = scalar_lea.sflag [#allocation3], %s237
        %s239 = sand.u32 %s70, 1
        %s240 = smul.addr %s239, 16
        %s241 = scalar_lea.vmem [#allocation7], %s240
        // Predicated region
        $region45: #{tpu_custom_call.1} parent=35 // pred_check
          %p242 = pneg %p83
        $region46: #{tpu_custom_call.1} parent=35 // pred_check_branch
          %244 = sbr.rel (%p242) target = $region48
        $region47: #{tpu_custom_call.1} parent=35 // pred_region
          %245 = dma.done %s238, 256
        $region48: #{tpu_custom_call.1} parent=35 // pred_fallthru
          _
        %s246 = sand.u32 %s20, 1
        %s247 = scalar_lea.sflag [#allocation3], %s246
        %s248 = sand.u32 %s96, 1
        %s249 = smul.addr %s248, 16
        %s250 = scalar_lea.vmem [#allocation8], %s249
        // Predicated region
        $region49: #{tpu_custom_call.1} parent=35 // pred_check
          %p251 = pneg %p109
        $region50: #{tpu_custom_call.1} parent=35 // pred_check_branch
          %253 = sbr.rel (%p251) target = $region52
        $region51: #{tpu_custom_call.1} parent=35 // pred_region
          %254 = dma.done %s247, 256
        $region52: #{tpu_custom_call.1} parent=35 // pred_fallthru
          _
        %p255 = pneg %p36
        %p256 = pneg %p33
        %p257 = pneg %p57
        %p258 = pneg %p54
        %s259 = sand.u32 %s20, 1
        %s260 = scalar_lea.sflag [#allocation3], %s259
        %s261 = sand.u32 %s70, 1
        %s262 = smul.addr %s261, 16
        %s263 = scalar_lea.vmem [#allocation7], %s262
        %p264 = pneg %p83
        %p265 = pneg %p80
        %s266 = sand.u32 %s20, 1
        %s267 = scalar_lea.sflag [#allocation3], %s266
        %s268 = sand.u32 %s96, 1
        %s269 = smul.addr %s268, 16
        %s270 = scalar_lea.vmem [#allocation8], %s269
        %p271 = pneg %p109
        %p272 = pneg %p106
        %p273 = pneg %p135
        %p274 = pneg %p132
        %s275 = sand.u32 %s122, 1
        %s276 = scalar_lea.sflag [#allocation4], %s275
        %s277 = sand.u32 %s122, 1
        %s278 = smul.addr %s277, 8
        %s279 = scalar_lea.vmem [#allocation9], %s278
        %v280 = vld [vmem:[%s241] sm:$0xff]
        %v281 = vld [vmem:[%s241 + $0x8] sm:$0xff]
        %v282 = vld [vmem:[%s250] sm:$0xff]
        %v283 = vld [vmem:[%s250 + $0x8] sm:$0xff]
        %v284 = vld [vmem:[#allocation2] sm:$0xff]
        %v285 = vld [vmem:[#allocation2 + $0x8] sm:$0xff]
        %v286 = vld [vmem:[#allocation5] sm:$0xff]
        %v287 = vld [vmem:[#allocation5 + $0x8] sm:$0xff]
        %v288 = vld [vmem:[#allocation5 + $0x10] sm:$0xff]
        %v289 = vld [vmem:[#allocation5 + $0x18] sm:$0xff]
        %v290 = vld [vmem:[#allocation5 + $0x20] sm:$0xff]
        %v291 = vld [vmem:[#allocation5 + $0x28] sm:$0xff]
        %v292 = vld [vmem:[#allocation5 + $0x30] sm:$0xff]
        %v293 = vld [vmem:[#allocation5 + $0x38] sm:$0xff]
        %v294 = vmul.f32 %v280, %v280
        %v295 = vmul.f32 %v281, %v281
        %v296 = vmul.f32 %v282, %v282
        %v297 = vmul.f32 %v283, %v283
        %v298 = vmul.f32 %v280, %v282
        %v299 = vmul.f32 %v281, %v283
        %vm300 = vcmask 523264
        %v302 = vsel %vm300, %v280, 0
        %v305 = vsel %vm300, %v281, 0
        %v308 = vsel %vm300, %v282, 0
        %v311 = vsel %vm300, %v283, 0
        %v314 = vsel %vm300, %v294, 0
        %v317 = vsel %vm300, %v295, 0
        %v320 = vsel %vm300, %v296, 0
        %v323 = vsel %vm300, %v297, 0
        %v326 = vsel %vm300, %v298, 0
        %v329 = vsel %vm300, %v299, 0
        %331 = vmatprep.subr.mxu0 0.0
        %332 = vmatpush1.msra.mxu0 %v286
        %333 = vmatprep.subr.mxu0 0.0
        %334 = vmatpush1.msra.mxu0 %v287
        %335 = vmatprep.subr.mxu0 0.0
        %336 = vmatpush1.msra.mxu0 %v288
        %337 = vmatprep.subr.mxu0 0.0
        %338 = vmatpush1.msra.mxu0 %v289
        %339 = vmatprep.subr.mxu0 0.0
        %340 = vmatpush1.msra.mxu0 %v290
        %341 = vmatprep.subr.mxu0 0.0
        %342 = vmatpush1.msra.mxu0 %v291
        %343 = vmatprep.subr.mxu0 0.0
        %344 = vmatpush1.msra.mxu0 %v292
        %345 = vmatprep.subr.mxu0 0.0
        %346 = vmatpush1.msra.mxu0 %v293
        %347 = vmatprep.subr.mxu0 0.0
        %348 = vmatpush1.msra.mxu0 0.0
        %349 = vmatprep.subr.mxu0 0.0
        %350 = vmatpush1.msra.mxu0 0.0
        %351 = vmatprep.subr.mxu0 0.0
        %352 = vmatpush1.msra.mxu0 0.0
        %353 = vmatprep.subr.mxu0 0.0
        %354 = vmatpush1.msra.mxu0 0.0
        %355 = vmatprep.subr.mxu0 0.0
        %356 = vmatpush1.msra.mxu0 0.0
        %357 = vmatprep.subr.mxu0 0.0
        %358 = vmatpush1.msra.mxu0 0.0
        %359 = vmatprep.subr.mxu0 0.0
        %360 = vmatpush1.msra.mxu0 0.0
        %361 = vmatprep.subr.mxu0 0.0
        %362 = vmatpush1.msra.mxu0 0.0
        %363 = vmatprep.subr.mxu0 0.0
        %364 = vmatpush1.msra.mxu0 0.0
        %365 = vmatprep.subr.mxu0 0.0
        %366 = vmatpush1.msra.mxu0 0.0
        %367 = vmatprep.subr.mxu0 0.0
        %368 = vmatpush1.msra.mxu0 0.0
        %369 = vmatprep.subr.mxu0 0.0
        %370 = vmatpush1.msra.mxu0 0.0
        %371 = vmatprep.subr.mxu0 0.0
        %372 = vmatpush1.msra.mxu0 0.0
        %373 = vmatprep.subr.mxu0 0.0
        %374 = vmatpush1.msra.mxu0 0.0
        %375 = vmatprep.subr.mxu0 0.0
        %376 = vmatpush1.msra.mxu0 0.0
        %377 = vmatprep.subr.mxu0 0.0
        %378 = vmatpush1.msra.mxu0 0.0
        %379 = vmatprep.subr.mxu0 0.0
        %380 = vmatpush1.msra.mxu0 0.0
        %381 = vmatprep.subr.mxu0 0.0
        %382 = vmatpush1.msra.mxu0 0.0
        %383 = vmatprep.subr.mxu0 0.0
        %384 = vmatpush1.msra.mxu0 0.0
        %385 = vmatprep.subr.mxu0 0.0
        %386 = vmatpush1.msra.mxu0 0.0
        %387 = vmatprep.subr.mxu0 0.0
        %388 = vmatpush1.msra.mxu0 0.0
        %389 = vmatprep.subr.mxu0 0.0
        %390 = vmatpush1.msra.mxu0 0.0
        %391 = vmatprep.subr.mxu0 0.0
        %392 = vmatpush1.msra.mxu0 0.0
        %393 = vmatprep.subr.mxu0 0.0
        %394 = vmatpush1.msra.mxu0 0.0
        %395 = vmatprep.mubr.f32.mxu0 0.0
        %396 = vmatmul.mubr.f32.gmra.mrb[0].mxu0 %v302
        %v397 = vpop.f32.mrb[0].mxu0
        %v398 = vadd.f32 0.0, %v397
        %v399 = vpop.f32.mrb[0].mxu0
        %400 = vmatprep.mubr.f32.mxu0 0.0
        %401 = vmatmul.mubr.f32.gmra.mrb[0].mxu0 %v305
        %v402 = vpop.f32.mrb[0].mxu0
        %v403 = vadd.f32 0.0, %v402
        %v404 = vpop.f32.mrb[0].mxu0
        %405 = vmatprep.mubr.f32.mxu0 0.0
        %406 = vmatmul.mubr.f32.gmra.mrb[0].mxu0 %v308
        %v407 = vpop.f32.mrb[0].mxu0
        %v408 = vadd.f32 0.0, %v407
        %v409 = vpop.f32.mrb[0].mxu0
        %410 = vmatprep.mubr.f32.mxu0 0.0
        %411 = vmatmul.mubr.f32.gmra.mrb[0].mxu0 %v311
        %v412 = vpop.f32.mrb[0].mxu0
        %v413 = vadd.f32 0.0, %v412
        %v414 = vpop.f32.mrb[0].mxu0
        %415 = vmatprep.mubr.f32.mxu0 0.0
        %416 = vmatmul.mubr.f32.gmra.mrb[0].mxu0 %v314
        %v417 = vpop.f32.mrb[0].mxu0
        %v418 = vadd.f32 0.0, %v417
        %v419 = vpop.f32.mrb[0].mxu0
        %420 = vmatprep.mubr.f32.mxu0 0.0
        %421 = vmatmul.mubr.f32.gmra.mrb[0].mxu0 %v317
        %v422 = vpop.f32.mrb[0].mxu0
        %v423 = vadd.f32 0.0, %v422
        %v424 = vpop.f32.mrb[0].mxu0
        %425 = vmatprep.mubr.f32.mxu0 0.0
        %426 = vmatmul.mubr.f32.gmra.mrb[0].mxu0 %v320
        %v427 = vpop.f32.mrb[0].mxu0
        %v428 = vadd.f32 0.0, %v427
        %v429 = vpop.f32.mrb[0].mxu0
        %430 = vmatprep.mubr.f32.mxu0 0.0
        %431 = vmatmul.mubr.f32.gmra.mrb[0].mxu0 %v323
        %v432 = vpop.f32.mrb[0].mxu0
        %v433 = vadd.f32 0.0, %v432
        %v434 = vpop.f32.mrb[0].mxu0
        %435 = vmatprep.mubr.f32.mxu0 0.0
        %436 = vmatmul.mubr.f32.gmra.mrb[0].mxu0 %v326
        %v437 = vpop.f32.mrb[0].mxu0
        %v438 = vadd.f32 0.0, %v437
        %v439 = vpop.f32.mrb[0].mxu0
        %440 = vmatprep.mubr.f32.mxu0 0.0
        %441 = vmatmul.mubr.f32.gmra.mrb[0].mxu0 %v329
        %v442 = vpop.f32.mrb[0].mxu0
        %v443 = vadd.f32 0.0, %v442
        %v444 = vpop.f32.mrb[0].mxu0
        %445 = vdwg.mxu0
        %vm446 = vcmask 130048
        %v448 = vsel %vm446, %v284, 0
        %v451 = vsel %vm446, %v285, 0
        %453 = vmatprep.subr.mxu0 0.0
        %454 = vmatpush1.msra.mxu0 %v398
        %455 = vmatprep.subr.mxu0 0.0
        %456 = vmatpush1.msra.mxu0 %v403
        %457 = vmatprep.subr.mxu0 0.0
        %458 = vmatpush1.msra.mxu0 0.0
        %459 = vmatprep.subr.mxu0 0.0
        %460 = vmatpush1.msra.mxu0 0.0
        %461 = vmatprep.subr.mxu0 0.0
        %462 = vmatpush1.msra.mxu0 0.0
        %463 = vmatprep.subr.mxu0 0.0
        %464 = vmatpush1.msra.mxu0 0.0
        %465 = vmatprep.subr.mxu0 0.0
        %466 = vmatpush1.msra.mxu0 0.0
        %467 = vmatprep.subr.mxu0 0.0
        %468 = vmatpush1.msra.mxu0 0.0
        %469 = vmatprep.subr.mxu0 0.0
        %470 = vmatpush1.msra.mxu0 0.0
        %471 = vmatprep.subr.mxu0 0.0
        %472 = vmatpush1.msra.mxu0 0.0
        %473 = vmatprep.subr.mxu0 0.0
        %474 = vmatpush1.msra.mxu0 0.0
        %475 = vmatprep.subr.mxu0 0.0
        %476 = vmatpush1.msra.mxu0 0.0
        %477 = vmatprep.subr.mxu0 0.0
        %478 = vmatpush1.msra.mxu0 0.0
        %479 = vmatprep.subr.mxu0 0.0
        %480 = vmatpush1.msra.mxu0 0.0
        %481 = vmatprep.subr.mxu0 0.0
        %482 = vmatpush1.msra.mxu0 0.0
        %483 = vmatprep.subr.mxu0 0.0
        %484 = vmatpush1.msra.mxu0 0.0
        %485 = vmatprep.subr.mxu0 0.0
        %486 = vmatpush1.msra.mxu0 0.0
        %487 = vmatprep.subr.mxu0 0.0
        %488 = vmatpush1.msra.mxu0 0.0
        %489 = vmatprep.subr.mxu0 0.0
        %490 = vmatpush1.msra.mxu0 0.0
        %491 = vmatprep.subr.mxu0 0.0
        %492 = vmatpush1.msra.mxu0 0.0
        %493 = vmatprep.subr.mxu0 0.0
        %494 = vmatpush1.msra.mxu0 0.0
        %495 = vmatprep.subr.mxu0 0.0
        %496 = vmatpush1.msra.mxu0 0.0
        %497 = vmatprep.subr.mxu0 0.0
        %498 = vmatpush1.msra.mxu0 0.0
        %499 = vmatprep.subr.mxu0 0.0
        %500 = vmatpush1.msra.mxu0 0.0
        %501 = vmatprep.subr.mxu0 0.0
        %502 = vmatpush1.msra.mxu0 0.0
        %503 = vmatprep.subr.mxu0 0.0
        %504 = vmatpush1.msra.mxu0 0.0
        %505 = vmatprep.subr.mxu0 0.0
        %506 = vmatpush1.msra.mxu0 0.0
        %507 = vmatprep.subr.mxu0 0.0
        %508 = vmatpush1.msra.mxu0 0.0
        %509 = vmatprep.subr.mxu0 0.0
        %510 = vmatpush1.msra.mxu0 0.0
        %511 = vmatprep.subr.mxu0 0.0
        %512 = vmatpush1.msra.mxu0 0.0
        %513 = vmatprep.subr.mxu0 0.0
        %514 = vmatpush1.msra.mxu0 0.0
        %515 = vmatprep.subr.mxu0 0.0
        %516 = vmatpush1.msra.mxu0 0.0
        %517 = vmatprep.mubr.f32.mxu0 0.0
        %518 = vmatmul.mubr.f32.gmra.mrb[0].mxu0 %v448
        %v519 = vpop.f32.mrb[0].mxu0
        %v520 = vadd.f32 0.0, %v519
        %v521 = vpop.f32.mrb[0].mxu0
        %522 = vmatprep.mubr.f32.mxu0 0.0
        %523 = vmatmul.mubr.f32.gmra.mrb[0].mxu0 %v451
        %v524 = vpop.f32.mrb[0].mxu0
        %v525 = vadd.f32 0.0, %v524
        %v526 = vpop.f32.mrb[0].mxu0
        %527 = vdwg.mxu0
        %528 = vmatprep.subr.mxu0 0.0
        %529 = vmatpush1.msra.mxu0 %v408
        %530 = vmatprep.subr.mxu0 0.0
        %531 = vmatpush1.msra.mxu0 %v413
        %532 = vmatprep.subr.mxu0 0.0
        %533 = vmatpush1.msra.mxu0 0.0
        %534 = vmatprep.subr.mxu0 0.0
        %535 = vmatpush1.msra.mxu0 0.0
        %536 = vmatprep.subr.mxu0 0.0
        %537 = vmatpush1.msra.mxu0 0.0
        %538 = vmatprep.subr.mxu0 0.0
        %539 = vmatpush1.msra.mxu0 0.0
        %540 = vmatprep.subr.mxu0 0.0
        %541 = vmatpush1.msra.mxu0 0.0
        %542 = vmatprep.subr.mxu0 0.0
        %543 = vmatpush1.msra.mxu0 0.0
        %544 = vmatprep.subr.mxu0 0.0
        %545 = vmatpush1.msra.mxu0 0.0
        %546 = vmatprep.subr.mxu0 0.0
        %547 = vmatpush1.msra.mxu0 0.0
        %548 = vmatprep.subr.mxu0 0.0
        %549 = vmatpush1.msra.mxu0 0.0
        %550 = vmatprep.subr.mxu0 0.0
        %551 = vmatpush1.msra.mxu0 0.0
        %552 = vmatprep.subr.mxu0 0.0
        %553 = vmatpush1.msra.mxu0 0.0
        %554 = vmatprep.subr.mxu0 0.0
        %555 = vmatpush1.msra.mxu0 0.0
        %556 = vmatprep.subr.mxu0 0.0
        %557 = vmatpush1.msra.mxu0 0.0
        %558 = vmatprep.subr.mxu0 0.0
        %559 = vmatpush1.msra.mxu0 0.0
        %560 = vmatprep.subr.mxu0 0.0
        %561 = vmatpush1.msra.mxu0 0.0
        %562 = vmatprep.subr.mxu0 0.0
        %563 = vmatpush1.msra.mxu0 0.0
        %564 = vmatprep.subr.mxu0 0.0
        %565 = vmatpush1.msra.mxu0 0.0
        %566 = vmatprep.subr.mxu0 0.0
        %567 = vmatpush1.msra.mxu0 0.0
        %568 = vmatprep.subr.mxu0 0.0
        %569 = vmatpush1.msra.mxu0 0.0
        %570 = vmatprep.subr.mxu0 0.0
        %571 = vmatpush1.msra.mxu0 0.0
        %572 = vmatprep.subr.mxu0 0.0
        %573 = vmatpush1.msra.mxu0 0.0
        %574 = vmatprep.subr.mxu0 0.0
        %575 = vmatpush1.msra.mxu0 0.0
        %576 = vmatprep.subr.mxu0 0.0
        %577 = vmatpush1.msra.mxu0 0.0
        %578 = vmatprep.subr.mxu0 0.0
        %579 = vmatpush1.msra.mxu0 0.0
        %580 = vmatprep.subr.mxu0 0.0
        %581 = vmatpush1.msra.mxu0 0.0
        %582 = vmatprep.subr.mxu0 0.0
        %583 = vmatpush1.msra.mxu0 0.0
        %584 = vmatprep.subr.mxu0 0.0
        %585 = vmatpush1.msra.mxu0 0.0
        %586 = vmatprep.subr.mxu0 0.0
        %587 = vmatpush1.msra.mxu0 0.0
        %588 = vmatprep.subr.mxu0 0.0
        %589 = vmatpush1.msra.mxu0 0.0
        %590 = vmatprep.subr.mxu0 0.0
        %591 = vmatpush1.msra.mxu0 0.0
        %592 = vmatprep.mubr.f32.mxu0 0.0
        %593 = vmatmul.mubr.f32.gmra.mrb[0].mxu0 %v448
        %v594 = vpop.f32.mrb[0].mxu0
        %v595 = vadd.f32 0.0, %v594
        %v596 = vpop.f32.mrb[0].mxu0
        %597 = vmatprep.mubr.f32.mxu0 0.0
        %598 = vmatmul.mubr.f32.gmra.mrb[0].mxu0 %v451
        %v599 = vpop.f32.mrb[0].mxu0
        %v600 = vadd.f32 0.0, %v599
        %v601 = vpop.f32.mrb[0].mxu0
        %602 = vdwg.mxu0
        %603 = vmatprep.subr.mxu0 0.0
        %604 = vmatpush1.msra.mxu0 %v418
        %605 = vmatprep.subr.mxu0 0.0
        %606 = vmatpush1.msra.mxu0 %v423
        %607 = vmatprep.subr.mxu0 0.0
        %608 = vmatpush1.msra.mxu0 0.0
        %609 = vmatprep.subr.mxu0 0.0
        %610 = vmatpush1.msra.mxu0 0.0
        %611 = vmatprep.subr.mxu0 0.0
        %612 = vmatpush1.msra.mxu0 0.0
        %613 = vmatprep.subr.mxu0 0.0
        %614 = vmatpush1.msra.mxu0 0.0
        %615 = vmatprep.subr.mxu0 0.0
        %616 = vmatpush1.msra.mxu0 0.0
        %617 = vmatprep.subr.mxu0 0.0
        %618 = vmatpush1.msra.mxu0 0.0
        %619 = vmatprep.subr.mxu0 0.0
        %620 = vmatpush1.msra.mxu0 0.0
        %621 = vmatprep.subr.mxu0 0.0
        %622 = vmatpush1.msra.mxu0 0.0
        %623 = vmatprep.subr.mxu0 0.0
        %624 = vmatpush1.msra.mxu0 0.0
        %625 = vmatprep.subr.mxu0 0.0
        %626 = vmatpush1.msra.mxu0 0.0
        %627 = vmatprep.subr.mxu0 0.0
        %628 = vmatpush1.msra.mxu0 0.0
        %629 = vmatprep.subr.mxu0 0.0
        %630 = vmatpush1.msra.mxu0 0.0
        %631 = vmatprep.subr.mxu0 0.0
        %632 = vmatpush1.msra.mxu0 0.0
        %633 = vmatprep.subr.mxu0 0.0
        %634 = vmatpush1.msra.mxu0 0.0
        %635 = vmatprep.subr.mxu0 0.0
        %636 = vmatpush1.msra.mxu0 0.0
        %637 = vmatprep.subr.mxu0 0.0
        %638 = vmatpush1.msra.mxu0 0.0
        %639 = vmatprep.subr.mxu0 0.0
        %640 = vmatpush1.msra.mxu0 0.0
        %641 = vmatprep.subr.mxu0 0.0
        %642 = vmatpush1.msra.mxu0 0.0
        %643 = vmatprep.subr.mxu0 0.0
        %644 = vmatpush1.msra.mxu0 0.0
        %645 = vmatprep.subr.mxu0 0.0
        %646 = vmatpush1.msra.mxu0 0.0
        %647 = vmatprep.subr.mxu0 0.0
        %648 = vmatpush1.msra.mxu0 0.0
        %649 = vmatprep.subr.mxu0 0.0
        %650 = vmatpush1.msra.mxu0 0.0
        %651 = vmatprep.subr.mxu0 0.0
        %652 = vmatpush1.msra.mxu0 0.0
        %653 = vmatprep.subr.mxu0 0.0
        %654 = vmatpush1.msra.mxu0 0.0
        %655 = vmatprep.subr.mxu0 0.0
        %656 = vmatpush1.msra.mxu0 0.0
        %657 = vmatprep.subr.mxu0 0.0
        %658 = vmatpush1.msra.mxu0 0.0
        %659 = vmatprep.subr.mxu0 0.0
        %660 = vmatpush1.msra.mxu0 0.0
        %661 = vmatprep.subr.mxu0 0.0
        %662 = vmatpush1.msra.mxu0 0.0
        %663 = vmatprep.subr.mxu0 0.0
        %664 = vmatpush1.msra.mxu0 0.0
        %665 = vmatprep.subr.mxu0 0.0
        %666 = vmatpush1.msra.mxu0 0.0
        %667 = vmatprep.mubr.f32.mxu0 0.0
        %668 = vmatmul.mubr.f32.gmra.mrb[0].mxu0 %v448
        %v669 = vpop.f32.mrb[0].mxu0
        %v670 = vadd.f32 0.0, %v669
        %v671 = vpop.f32.mrb[0].mxu0
        %672 = vmatprep.mubr.f32.mxu0 0.0
        %673 = vmatmul.mubr.f32.gmra.mrb[0].mxu0 %v451
        %v674 = vpop.f32.mrb[0].mxu0
        %v675 = vadd.f32 0.0, %v674
        %v676 = vpop.f32.mrb[0].mxu0
        %677 = vdwg.mxu0
        %678 = vmatprep.subr.mxu0 0.0
        %679 = vmatpush1.msra.mxu0 %v428
        %680 = vmatprep.subr.mxu0 0.0
        %681 = vmatpush1.msra.mxu0 %v433
        %682 = vmatprep.subr.mxu0 0.0
        %683 = vmatpush1.msra.mxu0 0.0
        %684 = vmatprep.subr.mxu0 0.0
        %685 = vmatpush1.msra.mxu0 0.0
        %686 = vmatprep.subr.mxu0 0.0
        %687 = vmatpush1.msra.mxu0 0.0
        %688 = vmatprep.subr.mxu0 0.0
        %689 = vmatpush1.msra.mxu0 0.0
        %690 = vmatprep.subr.mxu0 0.0
        %691 = vmatpush1.msra.mxu0 0.0
        %692 = vmatprep.subr.mxu0 0.0
        %693 = vmatpush1.msra.mxu0 0.0
        %694 = vmatprep.subr.mxu0 0.0
        %695 = vmatpush1.msra.mxu0 0.0
        %696 = vmatprep.subr.mxu0 0.0
        %697 = vmatpush1.msra.mxu0 0.0
        %698 = vmatprep.subr.mxu0 0.0
        %699 = vmatpush1.msra.mxu0 0.0
        %700 = vmatprep.subr.mxu0 0.0
        %701 = vmatpush1.msra.mxu0 0.0
        %702 = vmatprep.subr.mxu0 0.0
        %703 = vmatpush1.msra.mxu0 0.0
        %704 = vmatprep.subr.mxu0 0.0
        %705 = vmatpush1.msra.mxu0 0.0
        %706 = vmatprep.subr.mxu0 0.0
        %707 = vmatpush1.msra.mxu0 0.0
        %708 = vmatprep.subr.mxu0 0.0
        %709 = vmatpush1.msra.mxu0 0.0
        %710 = vmatprep.subr.mxu0 0.0
        %711 = vmatpush1.msra.mxu0 0.0
        %712 = vmatprep.subr.mxu0 0.0
        %713 = vmatpush1.msra.mxu0 0.0
        %714 = vmatprep.subr.mxu0 0.0
        %715 = vmatpush1.msra.mxu0 0.0
        %716 = vmatprep.subr.mxu0 0.0
        %717 = vmatpush1.msra.mxu0 0.0
        %718 = vmatprep.subr.mxu0 0.0
        %719 = vmatpush1.msra.mxu0 0.0
        %720 = vmatprep.subr.mxu0 0.0
        %721 = vmatpush1.msra.mxu0 0.0
        %722 = vmatprep.subr.mxu0 0.0
        %723 = vmatpush1.msra.mxu0 0.0
        %724 = vmatprep.subr.mxu0 0.0
        %725 = vmatpush1.msra.mxu0 0.0
        %726 = vmatprep.subr.mxu0 0.0
        %727 = vmatpush1.msra.mxu0 0.0
        %728 = vmatprep.subr.mxu0 0.0
        %729 = vmatpush1.msra.mxu0 0.0
        %730 = vmatprep.subr.mxu0 0.0
        %731 = vmatpush1.msra.mxu0 0.0
        %732 = vmatprep.subr.mxu0 0.0
        %733 = vmatpush1.msra.mxu0 0.0
        %734 = vmatprep.subr.mxu0 0.0
        %735 = vmatpush1.msra.mxu0 0.0
        %736 = vmatprep.subr.mxu0 0.0
        %737 = vmatpush1.msra.mxu0 0.0
        %738 = vmatprep.subr.mxu0 0.0
        %739 = vmatpush1.msra.mxu0 0.0
        %740 = vmatprep.subr.mxu0 0.0
        %741 = vmatpush1.msra.mxu0 0.0
        %742 = vmatprep.mubr.f32.mxu0 0.0
        %743 = vmatmul.mubr.f32.gmra.mrb[0].mxu0 %v448
        %v744 = vpop.f32.mrb[0].mxu0
        %v745 = vadd.f32 0.0, %v744
        %v746 = vpop.f32.mrb[0].mxu0
        %747 = vmatprep.mubr.f32.mxu0 0.0
        %748 = vmatmul.mubr.f32.gmra.mrb[0].mxu0 %v451
        %v749 = vpop.f32.mrb[0].mxu0
        %v750 = vadd.f32 0.0, %v749
        %v751 = vpop.f32.mrb[0].mxu0
        %752 = vdwg.mxu0
        %753 = vmatprep.subr.mxu0 0.0
        %754 = vmatpush1.msra.mxu0 %v438
        %755 = vmatprep.subr.mxu0 0.0
        %756 = vmatpush1.msra.mxu0 %v443
        %757 = vmatprep.subr.mxu0 0.0
        %758 = vmatpush1.msra.mxu0 0.0
        %759 = vmatprep.subr.mxu0 0.0
        %760 = vmatpush1.msra.mxu0 0.0
        %761 = vmatprep.subr.mxu0 0.0
        %762 = vmatpush1.msra.mxu0 0.0
        %763 = vmatprep.subr.mxu0 0.0
        %764 = vmatpush1.msra.mxu0 0.0
        %765 = vmatprep.subr.mxu0 0.0
        %766 = vmatpush1.msra.mxu0 0.0
        %767 = vmatprep.subr.mxu0 0.0
        %768 = vmatpush1.msra.mxu0 0.0
        %769 = vmatprep.subr.mxu0 0.0
        %770 = vmatpush1.msra.mxu0 0.0
        %771 = vmatprep.subr.mxu0 0.0
        %772 = vmatpush1.msra.mxu0 0.0
        %773 = vmatprep.subr.mxu0 0.0
        %774 = vmatpush1.msra.mxu0 0.0
        %775 = vmatprep.subr.mxu0 0.0
        %776 = vmatpush1.msra.mxu0 0.0
        %777 = vmatprep.subr.mxu0 0.0
        %778 = vmatpush1.msra.mxu0 0.0
        %779 = vmatprep.subr.mxu0 0.0
        %780 = vmatpush1.msra.mxu0 0.0
        %781 = vmatprep.subr.mxu0 0.0
        %782 = vmatpush1.msra.mxu0 0.0
        %783 = vmatprep.subr.mxu0 0.0
        %784 = vmatpush1.msra.mxu0 0.0
        %785 = vmatprep.subr.mxu0 0.0
        %786 = vmatpush1.msra.mxu0 0.0
        %787 = vmatprep.subr.mxu0 0.0
        %788 = vmatpush1.msra.mxu0 0.0
        %789 = vmatprep.subr.mxu0 0.0
        %790 = vmatpush1.msra.mxu0 0.0
        %791 = vmatprep.subr.mxu0 0.0
        %792 = vmatpush1.msra.mxu0 0.0
        %793 = vmatprep.subr.mxu0 0.0
        %794 = vmatpush1.msra.mxu0 0.0
        %795 = vmatprep.subr.mxu0 0.0
        %796 = vmatpush1.msra.mxu0 0.0
        %797 = vmatprep.subr.mxu0 0.0
        %798 = vmatpush1.msra.mxu0 0.0
        %799 = vmatprep.subr.mxu0 0.0
        %800 = vmatpush1.msra.mxu0 0.0
        %801 = vmatprep.subr.mxu0 0.0
        %802 = vmatpush1.msra.mxu0 0.0
        %803 = vmatprep.subr.mxu0 0.0
        %804 = vmatpush1.msra.mxu0 0.0
        %805 = vmatprep.subr.mxu0 0.0
        %806 = vmatpush1.msra.mxu0 0.0
        %807 = vmatprep.subr.mxu0 0.0
        %808 = vmatpush1.msra.mxu0 0.0
        %809 = vmatprep.subr.mxu0 0.0
        %810 = vmatpush1.msra.mxu0 0.0
        %811 = vmatprep.subr.mxu0 0.0
        %812 = vmatpush1.msra.mxu0 0.0
        %813 = vmatprep.subr.mxu0 0.0
        %814 = vmatpush1.msra.mxu0 0.0
        %815 = vmatprep.subr.mxu0 0.0
        %816 = vmatpush1.msra.mxu0 0.0
        %817 = vmatprep.mubr.f32.mxu0 0.0
        %818 = vmatmul.mubr.f32.gmra.mrb[0].mxu0 %v448
        %v819 = vpop.f32.mrb[0].mxu0
        %v820 = vadd.f32 0.0, %v819
        %v821 = vpop.f32.mrb[0].mxu0
        %822 = vmatprep.mubr.f32.mxu0 0.0
        %823 = vmatmul.mubr.f32.gmra.mrb[0].mxu0 %v451
        %v824 = vpop.f32.mrb[0].mxu0
        %v825 = vadd.f32 0.0, %v824
        %v826 = vpop.f32.mrb[0].mxu0
        %827 = vdwg.mxu0
        %v828 = vmul.f32 %v520, %v520
        %v829 = vmul.f32 %v525, %v525
        %v830 = vmul.f32 %v595, %v595
        %v831 = vmul.f32 %v600, %v600
        %v832 = vmul.f32 %v520, %v595
        %v833 = vmul.f32 %v525, %v600
        %v834 = vsub.f32 %v670, %v828
        %v835 = vsub.f32 %v675, %v829
        %v836 = vsub.f32 %v745, %v830
        %v837 = vsub.f32 %v750, %v831
        %v838 = vsub.f32 %v820, %v832
        %v839 = vsub.f32 %v825, %v833
        %v840 = vmul.f32 %v832, 2.0
        %v841 = vmul.f32 %v833, 2.0
        %v842 = vadd.f32 %v840, 0.0001
        %v843 = vadd.f32 %v841, 0.0001
        %v844 = vmul.f32 %v838, 2.0
        %v845 = vmul.f32 %v839, 2.0
        %v846 = vadd.f32 %v844, 0.0009
        %v847 = vadd.f32 %v845, 0.0009
        %v848 = vmul.f32 %v842, %v846
        %v849 = vmul.f32 %v843, %v847
        %v850 = vadd.f32 %v828, %v830
        %v851 = vadd.f32 %v829, %v831
        %v852 = vadd.f32 %v850, 0.0001
        %v853 = vadd.f32 %v851, 0.0001
        %v854 = vadd.f32 %v834, %v836
        %v855 = vadd.f32 %v835, %v837
        %v856 = vadd.f32 %v854, 0.0009
        %v857 = vadd.f32 %v855, 0.0009
        %v858 = vmul.f32 %v852, %v856
        %v859 = vmul.f32 %v853, %v857
        %v860 = vrcp.pop %v858
        %v861 = vmul.f32 %v848, %v860
        %v862 = vrcp.pop %v859
        %v863 = vmul.f32 %v849, %v862
        %v864 = vsel %vm300, %v861, 0.0
        %v865 = vsel %vm300, %v863, 0.0
        %v866 = vadd.f32 %v864, %v865
        %867 = vadd.xlane.f32.xlu0 %v866
        %v868 = vpop.xlane.xlu0 %867
        %v869 = vrot.slane %v868, 4
        %v870 = vadd.f32 %v868, %v869
        %v871 = vrot.slane %v870, 2
        %v872 = vadd.f32 %v870, %v871
        %v873 = vrot.slane %v872, 1
        %v874 = vadd.f32 %v872, %v873
        %s875 = vtos %v874
        %v876 = vstv %s875
        %877 = vst [vmem:[%s279] sm:$0xff] %v876
        %s878 = sand.u32 %s122, 1
        %s879 = scalar_lea.sflag [#allocation4], %s878
        %s880 = sand.u32 %s122, 1
        %s881 = smul.addr %s880, 8
        %s882 = scalar_lea.vmem [#allocation9], %s881
        // Predicated region
        $region53: #{tpu_custom_call.1} parent=35 // pred_check
          %p883 = pneg %p132
        $region54: #{tpu_custom_call.1} parent=35 // pred_check_branch
          %885 = sbr.rel (%p883) target = $region56
        $region55: #{tpu_custom_call.1} parent=35 // pred_region
          %s887 = ssub.s32 128, 128
          %888 = vsyncadd %s879, %s887
          %s889 = smul.addr %s20, 128
          %s890 = scalar_lea.hbm %s4, %s889
          %s892 = sshll.u32 %s882, 4
          %s893 = int_to_ptr.vmem [resolvable:$true] %s892
          %895 = dma.vmem_to_hbm [thread:$0]  %s893, 128, %s890, %s879
        $region56: #{tpu_custom_call.1} parent=35 // pred_fallthru
          _
      $region36: #{tpu_custom_call.1} parent=5 // pred_fallthru
        _
      %p896 = scmp.le.s32.totalorder 2, %s15
      // Predicated region
      $region57: #{tpu_custom_call.1} parent=5 // pred_check
        %p897 = pneg %p896
      $region58: #{tpu_custom_call.1} parent=5 // pred_check_branch
        %899 = sbr.rel (%p897) target = $region60
      $region59: #{tpu_custom_call.1} parent=5 // pred_region
        %s900 = ssub.s32 %s15, 2
        // Predicated region
        $region61: #{tpu_custom_call.1} parent=59 // pred_check
          %p901 = pneg %p138
        $region62: #{tpu_custom_call.1} parent=59 // pred_check_branch
          %903 = sbr.rel (%p901) target = $region64
        $region63: #{tpu_custom_call.1} parent=59 // pred_region
          %s904 = sand.u32 %s123, 1
          %s905 = scalar_lea.sflag [#allocation4], %s904
          %s906 = sand.u32 %s123, 1
          %s907 = smul.addr %s906, 8
          %s908 = scalar_lea.vmem [#allocation9], %s907
          %909 = dma.done %s905, 128
        $region64: #{tpu_custom_call.1} parent=59 // pred_fallthru
          _
      $region60: #{tpu_custom_call.1} parent=5 // pred_fallthru
        _
    $region6: #{tpu_custom_call.1} parent=1 // loop_footer
      %s19 = sadd.s32 1, %s15
    $region7: #{tpu_custom_call.1} parent=1 // loop_footer_branch
      %14 = sbr.rel target = $region3
    $region8: #{tpu_custom_call.1} parent=1 // loop_exit
      _
    %910 = vsyncpa [#allocation3], 1
    %s911 = scalar_lea.sflag [#allocation3], 1
    %912 = vsyncpa %s911, 1
    %913 = vsyncpa [#allocation6], 1
    %914 = vsyncpa [#allocation4], 1
    %s915 = scalar_lea.sflag [#allocation4], 1
    %916 = vsyncpa %s915, 1

</llo_original>
